<compile_context>
chip_gen: v7x
topology: tpu7x:2x2x1
jax: 0.10.0
libtpu: 0.0.40
codegen_flags: <defaults>
</compile_context>

<pallas_src>
import math

import numpy as np

import jax
import jax.numpy as jnp
from jax.experimental import pallas as pl
from jax.experimental.pallas import tpu as pltpu


# ----------------------------------------------------------------------------
# Parameter / buffer construction (glue, plain numpy) — mirrors the torch __init__
# ----------------------------------------------------------------------------
def build_pe(embed_dim: int, downsampling: int) -> jnp.ndarray:
    # The torch module itself requires an even embed_dim (pe[:,1::2] assignment).
    assert embed_dim % 2 == 0, "embed_dim must be even (matches the torch module)"
    max_len = 11 + 80 // downsampling
    n_sampled = 80 // downsampling

    position = np.zeros((max_len,), dtype=np.float64)
    position[:11] = np.arange(11, dtype=np.float64)
    # torch.linspace(11, 91, n).long() truncates toward zero; compute in float64 to
    # avoid off-by-one truncation from float32 rounding.
    position[11:] = np.linspace(11.0, 91.0, n_sampled).astype(np.int64).astype(np.float64)

    div_term = np.exp(
        np.arange(0, embed_dim, 2, dtype=np.float64) * (-math.log(10000.0) / embed_dim)
    )
    angles = position[:, None] * div_term[None, :]  # (max_len, D/2)

    pe = np.zeros((max_len, embed_dim), dtype=np.float32)
    pe[:, 0::2] = np.sin(angles)  # same slice-assignment layout as the torch code
    pe[:, 1::2] = np.cos(angles)
    return jnp.asarray(pe)


# ----------------------------------------------------------------------------
# Pallas kernel: lane-dense broadcast add; accumulate in f32, cast at the store.
#   x_ref : (TB, TC)   current block of flattened batch rows (x dtype)
#   pe_ref: (1,  TC)   positional-encoding slice (f32)
# ----------------------------------------------------------------------------
def add_pe_kernel(x_ref, pe_ref, o_ref):
    x = x_ref[...].astype(jnp.float32)
    o_ref[...] = (x + pe_ref[...]).astype(o_ref.dtype)


# ----------------------------------------------------------------------------
# Tiling policy (per-chip)
# ----------------------------------------------------------------------------
def _chip_config():
    """(target_tile_bytes, num_tensorcores) per TPU generation."""
    kind = ""
    try:
        kind = jax.devices()[0].device_kind.lower()
    except Exception:
        pass
    if "v7" in kind:
        return 4 << 20, 2          # 32 MiB scoped-VMEM default, 2 TCs per chip
    if "v6" in kind:
        return 4 << 20, 1          # 32 MiB scoped-VMEM default, 1 TC
    if "v5" in kind:
        return 2 << 20, 1          # v5e: 16 MiB scoped-VMEM default, 1 TC
    return 2 << 20, 1              # conservative for unknown chips


def _choose_tiling(B: int, C: int, itemsize: int, target_tile_bytes: int, num_cores: int):
    """Pick (tb, tc): rows / lane-dense columns per block.

    Rules: tb multiple of the dtype-aware sublane pack (or the full extent),
    tc multiple of 128 (or the full extent), ragged tails allowed (pl.cdiv grid),
    ~target_tile_bytes per x block, and >= num_cores grid steps when it matters.
    """
    rows_align = max(8, 32 // max(itemsize, 1))   # 8 f32, 16 bf16, 32 int8/fp8
    row_bytes = C * itemsize

    # --- columns per block: only split the lane axis if a single row blows the budget ---
    tc = C
    if row_bytes > target_tile_bytes and C > 128:
        tc = max(128, (target_tile_bytes // max(rows_align * itemsize, 1)) // 128 * 128)
        tc = min(tc, (C // 128) * 128)

    # --- rows per block ---
    if B <= rows_align:
        tb = B                                     # full extent: always legal, one step
    else:
        block_row_bytes = tc * itemsize
        tb = max(1, target_tile_bytes // max(block_row_bytes, 1))
        if num_cores > 1:
            tb = min(tb, pl.cdiv(B, num_cores))    # >= num_cores row steps (v7x)
        tb = min(tb, B)
        tb = max(rows_align, (tb // rows_align) * rows_align)
        tb = min(tb, B)

    # --- v7x: if the batch alone gives a single step, split lanes so both TCs get work ---
    if (num_cores > 1 and pl.cdiv(B, tb) < num_cores and tc == C
            and C % (128 * num_cores) == 0 and tb * row_bytes >= (1 << 20)):
        tc = C // num_cores

    return tb, tc


# ----------------------------------------------------------------------------
# Forward pass wrapper
# ----------------------------------------------------------------------------
def custom_positional_encoding(
    x: jnp.ndarray,
    pe: jnp.ndarray,
    *,
    min_pallas_bytes: int = 256 << 10,
    force_pallas: bool = False,
    donate_x: bool = False,
) -> jnp.ndarray:
    """Forward of CustomPositionalEncoding. x: (B, S, D); pe: (max_len, D), S <= max_len."""
    B, S, D = x.shape
    C = S * D
    itemsize = jnp.dtype(x.dtype).itemsize

    # Small-input bypass: for tiny tensors the pallas_call fixed cost (and the extra
    # HBM round-trip of x vs. XLA fusion) dominates — just let XLA do the add.
    if not force_pallas and B * C * itemsize < min_pallas_bytes:
        return (x.astype(jnp.float32) + pe[:S, :].astype(jnp.float32)[None]).astype(x.dtype)

    # Wrapper-side layout plumbing (free): slice + flatten pe once, keep it f32.
    pe_row = pe[:S, :].reshape(1, C).astype(jnp.float32)   # (1, S*D)
    x2d = x.reshape(B, C)                                   # (B, S*D), lane-dense last dim

    target_tile_bytes, num_cores = _chip_config()
    tb, tc = _choose_tiling(B, C, itemsize, target_tile_bytes, num_cores)
    grid = (pl.cdiv(B, tb), pl.cdiv(C, tc))                  # ragged tails OK (masked)

    out2d = pl.pallas_call(
        add_pe_kernel,
        out_shape=jax.ShapeDtypeStruct((B, C), x.dtype),
        grid=grid,
        in_specs=[
            pl.BlockSpec((tb, tc), lambda i, j: (i, j)),     # x rows: large lane-dense blocks
            pl.BlockSpec((1, tc), lambda i, j: (0, j)),      # pe: constant over row steps
        ],
        out_specs=pl.BlockSpec((tb, tc), lambda i, j: (i, j)),
        compiler_params=pltpu.CompilerParams(
            dimension_semantics=("parallel", "parallel"),
        ),
        input_output_aliases=({0: 0} if donate_x else {}),   # reuse x's HBM buffer if donated
    )(x2d, pe_row)

    return out2d.reshape(B, S, D)


# ----------------------------------------------------------------------------
# Demo / correctness check
# ----------------------------------------------------------------------------
if __name__ == "__main__":
    embed_dim = 32
    downsampling = 16          # -> max_len = 11 + 80 // 16 = 16
    batch = 2
    seq = 16                   # uses the full positional table

    pe = build_pe(embed_dim, downsampling)

    key = jax.random.PRNGKey(0)
    x = jax.random.normal(key, (batch, seq, embed_dim), dtype=jnp.float32)
    ref = x + pe[:seq, :][None, :, :]

    # 1) Pallas path (forced, since the demo input is below the bypass threshold).
    out = custom_positional_encoding(x, pe, force_pallas=True)
    out = jax.block_until_ready(out)
    assert out.shape == (batch, seq, embed_dim)
    assert jnp.allclose(out, ref, atol=1e-6, rtol=1e-6), "pallas path mismatch vs reference"

    # 2) Default path (tiny input -> plain-JAX bypass) must match too.
    out_bypass = jax.block_until_ready(custom_positional_encoding(x, pe))
    assert jnp.allclose(out_bypass, ref, atol=1e-6, rtol=1e-6), "bypass path mismatch"

    # 3) Slightly larger batch to exercise the row-tiling policy through the kernel.
    key2 = jax.random.PRNGKey(0)
    x2 = jax.random.normal(key2, (64, seq, embed_dim), dtype=jnp.float32)
    out2 = jax.block_until_ready(custom_positional_encoding(x2, pe, force_pallas=True))
    ref2 = x2 + pe[:seq, :][None, :, :]
    assert jnp.allclose(out2, ref2, atol=1e-6, rtol=1e-6), "tiled pallas path mismatch"

    print("KERNEL_OK")
</pallas_src>

<mosaic_0001>
module attributes {stable_mosaic.version = 11 : i64} {
  func.func @add_pe_kernel(%arg0: i32, %arg1: i32, %arg2: memref<2x512xf32, #tpu.memory_space<vmem>>, %arg3: memref<1x512xf32, #tpu.memory_space<vmem>>, %arg4: memref<2x512xf32, #tpu.memory_space<vmem>>) attributes {dimension_semantics = [#tpu.dimension_semantics<parallel>, #tpu.dimension_semantics<parallel>], iteration_bounds = array<i64: 1, 1>, scalar_prefetch = 0 : i64, scratch_operands = 0 : i64, tpu.core_type = #tpu.core_type<tc>, window_params = [{transform_indices = @transform_0, window_bounds = array<i64: 2, 512>}, {transform_indices = @transform_1, window_bounds = array<i64: 1, 512>}, {transform_indices = @transform_2, window_bounds = array<i64: 2, 512>}]} {
    %c0 = arith.constant 0 : index
    %c0_0 = arith.constant 0 : index
    %0 = vector.load %arg2[%c0, %c0_0] : memref<2x512xf32, #tpu.memory_space<vmem>>, vector<2x512xf32>
    %c0_1 = arith.constant 0 : index
    %c0_2 = arith.constant 0 : index
    %1 = vector.load %arg3[%c0_1, %c0_2] : memref<1x512xf32, #tpu.memory_space<vmem>>, vector<1x512xf32>
    %2 = vector.broadcast %1 : vector<1x512xf32> to vector<2x512xf32>
    %3 = arith.addf %0, %2 : vector<2x512xf32>
    %c0_3 = arith.constant 0 : index
    %c0_4 = arith.constant 0 : index
    %4 = vector.load %arg4[%c0_3, %c0_4] : memref<2x512xf32, #tpu.memory_space<vmem>>, vector<2x512xf32>
    tpu.vector_store %arg4[%c0_3, %c0_4], %3 {strides = array<i32>} : memref<2x512xf32, #tpu.memory_space<vmem>>, vector<2x512xf32>,
    return
  }
  func.func @transform_0(%arg0: i32, %arg1: i32) -> (i32, i32) {
    %c0_i32 = arith.constant 0 : i32
    return %arg0, %arg1 : i32, i32
  }
  func.func @transform_1(%arg0: i32, %arg1: i32) -> (i32, i32) {
    %c0_i32 = arith.constant 0 : i32
    %c0_i32_0 = arith.constant 0 : i32
    return %c0_i32, %arg1 : i32, i32
  }
  func.func @transform_2(%arg0: i32, %arg1: i32) -> (i32, i32) {
    %c0_i32 = arith.constant 0 : i32
    return %arg0, %arg1 : i32, i32
  }
}

</mosaic_0001>

<llo_original>
// kernel: tpu_custom_call.1
$region0: #{tpu_custom_call.1}
  #allocation0 [shape = 'u32[]', space=smem, size = 0x4, offset = 0x4, fixed_abs, tag = 'smem constant byte address 0x4 - core index']
  #allocation1 [shape = 'u32[144,128]{1,0:T(1,128)}', space=vmem, size = 0x12000, scoped, tag = 'internal scratch']
  %s0 = inlined_call_operand.hbm [shape: f32[2,512], index: 0, kind: input, shape index: {}]
  %s1 = inlined_call_operand.hbm [shape: f32[1,512], index: 1, kind: input, shape index: {}]
  %s2 = inlined_call_operand.hbm [shape: f32[2,512], index: 2, kind: output, shape index: {}]
  %s3 = sld [smem:[#allocation0]]
  $region26: #{tpu_custom_call.1} parent=0
    _
  %s5 = ssub.s32 1, %s3
  %s6 = scalar_select 0, %s5, %s3
  $region1: #{tpu_custom_call.1} parent=0
    #allocation2 [shape = 'u8[4096]{0}', space=vmem, size = 0x1000, scoped, tag = 'input window, operand 0, single buffered']
    #allocation3 [shape = 's32[1]{0}', space=sflag, size = 0x4, scoped, tag = 'scoped memory for tpu_custom_call.1']
    #allocation4 [shape = 's32[1]{0}', space=sflag, size = 0x4, scoped, tag = 'scoped memory for tpu_custom_call.1']
    #allocation5 [shape = 'u8[2048]{0}', space=vmem, size = 0x800, scoped, tag = 'input window, operand 1, single buffered']
    #allocation6 [shape = 's32[1]{0}', space=sflag, size = 0x4, scoped, tag = 'scoped memory for tpu_custom_call.1']
    #allocation7 [shape = 'u8[4096]{0}', space=vmem, size = 0x1000, scoped, tag = 'output window, operand 0, single buffered']
    %7 = vsyncpa [#allocation3], 0
    %8 = vsyncpa [#allocation6], 0
    %9 = vsyncpa [#allocation4], 0
    // Predicated region
    $region2: #{tpu_custom_call.1} parent=1 // pred_check
      _
    $region3: #{tpu_custom_call.1} parent=1 // pred_check_branch
      %11 = sbr.rel (0) target = $region5
    $region4: #{tpu_custom_call.1} parent=1 // pred_region
      %s13 = ssub.s32 128, 128
      %14 = vsyncadd [#allocation3], %s13
      %s16 = sshll.u32 [#allocation2], 4
      %s17 = int_to_ptr.vmem [resolvable:$true] %s16
      %19 = dma.hbm_to_vmem [thread:$0]  %s0, 128, %s17, [#allocation3]
    $region5: #{tpu_custom_call.1} parent=1 // pred_fallthru
      _
    // Predicated region
    $region6: #{tpu_custom_call.1} parent=1 // pred_check
      _
    $region7: #{tpu_custom_call.1} parent=1 // pred_check_branch
      %21 = sbr.rel (0) target = $region9
    $region8: #{tpu_custom_call.1} parent=1 // pred_region
      %s23 = ssub.s32 64, 64
      %24 = vsyncadd [#allocation6], %s23
      %s26 = sshll.u32 [#allocation5], 4
      %s27 = int_to_ptr.vmem [resolvable:$true] %s26
      %29 = dma.hbm_to_vmem [thread:$0]  %s1, 64, %s27, [#allocation6]
    $region9: #{tpu_custom_call.1} parent=1 // pred_fallthru
      _
    // Predicated region
    $region10: #{tpu_custom_call.1} parent=1 // pred_check
      _
    $region11: #{tpu_custom_call.1} parent=1 // pred_check_branch
      %31 = sbr.rel (0) target = $region13
    $region12: #{tpu_custom_call.1} parent=1 // pred_region
      %32 = dma.done [#allocation3], 128
    $region13: #{tpu_custom_call.1} parent=1 // pred_fallthru
      _
    // Predicated region
    $region14: #{tpu_custom_call.1} parent=1 // pred_check
      _
    $region15: #{tpu_custom_call.1} parent=1 // pred_check_branch
      %34 = sbr.rel (0) target = $region17
    $region16: #{tpu_custom_call.1} parent=1 // pred_region
      %35 = dma.done [#allocation6], 64
    $region17: #{tpu_custom_call.1} parent=1 // pred_fallthru
      _
    %v36 = vld [vmem:[#allocation2] sm:$0xff]
    %v37 = vld [vmem:[#allocation5] sm:$0xf]
    %v39 = vlaneseq
    %v40 = vshrl.u32 %v39, 7
    %v41 = vsub.s32 0, %v40
    %v42 = vrot.slane %v37, %v41
    %v43 = vlaneseq
    %v44 = vshrl.u32 %v43, 7
    %v45 = vsub.s32 1, %v44
    %v46 = vrot.slane %v37, %v45
    %v47 = vlaneseq
    %v48 = vshrl.u32 %v47, 7
    %v49 = vsub.s32 2, %v48
    %v50 = vrot.slane %v37, %v49
    %v51 = vlaneseq
    %v52 = vshrl.u32 %v51, 7
    %v53 = vsub.s32 3, %v52
    %v54 = vrot.slane %v37, %v53
    %v55 = vcombine.low %v42, %v46
    %v56 = vcombine.low %v50, %v54
    %v58 = vunpack.c.l.s4 1983009808
    %v59 = vunpack.c.0.s8 %v58
    %v60 = vlaneseq
    %v61 = vshrl.u32 %v60, 7
    %v62 = vsub.s32 %v59, %v61
    %v63 = vrot.slane %v55, %v62
    %v65 = vunpack.c.l.s4 1983009808
    %v66 = vunpack.c.0.s8 %v65
    %v67 = vlaneseq
    %v68 = vshrl.u32 %v67, 7
    %v69 = vsub.s32 %v66, %v68
    %v70 = vrot.slane %v56, %v69
    %v71 = vcombine.low %v63, %v70
    %v73 = vadd.f32 %v36, %v71
    %74 = vst [vmem:[#allocation7] sm:$0xff] %v73
    // Predicated region
    $region18: #{tpu_custom_call.1} parent=1 // pred_check
      _
    $region19: #{tpu_custom_call.1} parent=1 // pred_check_branch
      %76 = sbr.rel (0) target = $region21
    $region20: #{tpu_custom_call.1} parent=1 // pred_region
      %s78 = ssub.s32 128, 128
      %79 = vsyncadd [#allocation4], %s78
      %s81 = sshll.u32 [#allocation7], 4
      %s82 = int_to_ptr.vmem [resolvable:$true] %s81
      %84 = dma.vmem_to_hbm [thread:$0]  %s82, 128, %s2, [#allocation4]
    $region21: #{tpu_custom_call.1} parent=1 // pred_fallthru
      _
    // Predicated region
    $region22: #{tpu_custom_call.1} parent=1 // pred_check
      _
    $region23: #{tpu_custom_call.1} parent=1 // pred_check_branch
      %86 = sbr.rel (0) target = $region25
    $region24: #{tpu_custom_call.1} parent=1 // pred_region
      %87 = dma.done [#allocation4], 128
    $region25: #{tpu_custom_call.1} parent=1 // pred_fallthru
      _
    %88 = vsyncpa [#allocation3], 1
    %89 = vsyncpa [#allocation6], 1
    %90 = vsyncpa [#allocation4], 1

</llo_original>
